<compile_context>
chip_gen: v7x
topology: tpu7x:2x2x1
jax: 0.10.0
libtpu: 0.0.40
codegen_flags: <defaults>
</compile_context>

<pallas_src>
import math

import jax
import jax.numpy as jnp
from jax.experimental import pallas as pl
from jax.experimental.pallas import tpu as pltpu


def _dma_copy_kernel(x_hbm, o_hbm, sem):
    # Single whole-array HBM -> HBM DMA.  Never touches VMEM or vregs:
    # the identity "reshape copy" is purely DMA-bandwidth bound.
    cp = pltpu.make_async_copy(x_hbm, o_hbm, sem)
    cp.start()
    cp.wait()


def _pallas_identity_copy_flat(flat, lane_width):
    """Copy a flat, lane-aligned element stream with one HBM->HBM DMA."""
    n = flat.shape[0]
    C = lane_width
    R = n // C
    flat2d = flat.reshape(R, C)                        # metadata-only reshape

    itemsize = jnp.dtype(flat.dtype).itemsize
    out2d = pl.pallas_call(
        _dma_copy_kernel,
        out_shape=jax.ShapeDtypeStruct((R, C), flat.dtype),
        in_specs=[pl.BlockSpec(memory_space=pl.ANY)],   # raw HBM ref, no auto-DMA
        out_specs=pl.BlockSpec(memory_space=pl.ANY),    # raw HBM ref, no auto-DMA
        scratch_shapes=[pltpu.SemaphoreType.DMA],
        compiler_params=pltpu.CompilerParams(has_side_effects=True),
        cost_estimate=pl.CostEstimate(
            flops=0, transcendentals=0, bytes_accessed=2 * n * itemsize),
    )(flat2d)
    return out2d.reshape(n)                            # metadata-only reshape


def _resolve_shape(shape, total):
    """Resolve a torch-style target shape (single -1 allowed) and validate it."""
    shape = list(shape)
    neg = [i for i, s in enumerate(shape) if s == -1]
    if len(neg) > 1:
        raise ValueError("only one dimension may be -1")
    if neg:
        known = 1
        for s in shape:
            if s != -1:
                known *= s
        if known == 0 or total % known != 0:
            raise ValueError(f"cannot reshape {total} elements into {tuple(shape)}")
        shape[neg[0]] = total // known
    if math.prod(shape) != total:
        raise ValueError(f"cannot reshape {total} elements into {tuple(shape)}")
    return tuple(shape)


def reshape_forward(x, shape):
    """JAX/Pallas equivalent of Reshape(*shape)(x) == x.view(shape)."""
    total = x.size
    shape = _resolve_shape(shape, total)

    flat = jnp.reshape(x, (-1,))                       # row-major; metadata only

    # Widest lane dim (multiple of 128) dividing the element count.
    lane_width = next(
        (c for c in (4096, 2048, 1024, 512, 256, 128) if total % c == 0), None)
    if lane_width is None or total == 0:
        # Not lane-alignable without padding traffic.  A contiguous reshape is
        # metadata-only anyway, so return it directly (exact .view() semantics).
        return jnp.reshape(flat, shape)

    out_flat = _pallas_identity_copy_flat(flat, lane_width)
    return jnp.reshape(out_flat, shape)                # metadata only


if __name__ == "__main__":
    key = jax.random.PRNGKey(0)
    # Input consistent with a small NCHW activation: (2, 4, 16, 16)
    x = jax.random.normal(key, (2, 4, 16, 16), dtype=jnp.float32)

    # Reshape(2, -1): flatten everything but the batch dim.
    y = reshape_forward(x, (2, -1))
    jax.block_until_ready(y)

    y_ref = jnp.reshape(x, (2, 4 * 16 * 16))
    assert y.shape == y_ref.shape, (y.shape, y_ref.shape)
    assert y.dtype == x.dtype
    assert bool(jnp.all(y == y_ref))

    # bf16 path — same single-DMA kernel, different dtype.
    xb = x.astype(jnp.bfloat16)
    yb = reshape_forward(xb, (8, -1))
    jax.block_until_ready(yb)
    assert bool(jnp.all(yb == jnp.reshape(xb, (8, 256))))

    # Non-128-divisible element count exercises the metadata-only fallback.
    xs = jax.random.normal(key, (3, 5, 7), dtype=jnp.float32)
    ys = reshape_forward(xs, (-1,))
    jax.block_until_ready(ys)
    assert bool(jnp.all(ys == jnp.reshape(xs, (105,))))

    print("KERNEL_OK")
</pallas_src>

<mosaic_0001>
module attributes {stable_mosaic.version = 11 : i64} {
  func.func @_dma_copy_kernel(%arg0: memref<1x2048xf32, #tpu.memory_space<any>>, %arg1: memref<1x2048xf32, #tpu.memory_space<any>>, %arg2: memref<!tpu.dma_semaphore, #tpu.memory_space<semaphore_mem>>) attributes {dimension_semantics = [], scalar_prefetch = 0 : i64, scratch_operands = 1 : i64, tpu.core_type = #tpu.core_type<tc>} {
    tpu.enqueue_dma source(%arg0 : memref<1x2048xf32, #tpu.memory_space<any>>) target(%arg1 : memref<1x2048xf32, #tpu.memory_space<any>>) target_semaphore(%arg2 : memref<!tpu.dma_semaphore, #tpu.memory_space<semaphore_mem>>)
    tpu.wait_dma2 semaphore(%arg2 : memref<!tpu.dma_semaphore, #tpu.memory_space<semaphore_mem>>) src(%arg0 : memref<1x2048xf32, #tpu.memory_space<any>>) dst(%arg1 : memref<1x2048xf32, #tpu.memory_space<any>>)
    return
  }
}

</mosaic_0001>

<llo_original>
// kernel: tpu_custom_call.1
$region0: #{tpu_custom_call.1}
  #allocation0 [shape = 'u32[]', space=smem, size = 0x4, offset = 0x4, fixed_abs, tag = 'smem constant byte address 0x4 - core index']
  #allocation1 [shape = 'u32[144,128]{1,0:T(1,128)}', space=vmem, size = 0x12000, scoped, tag = 'internal scratch']
  #allocation2 [shape = 's32[1]{0}', space=sflag, size = 0x4, scoped, tag = 'scratch operand']
  #allocation3 [shape = 's32[]', space=sflag, size = 0x4, offset = 0, fixed_abs, tag = 'sflag constant byte address 0x0 - dummy sync flag']
  #allocation4 [shape = 'u32[0]{0}', space=smem, size = 0, offset = 0, fixed_abs, tag = 'smem constant byte address 0x0 - null']
  %s0 = inlined_call_operand.hbm [shape: f32[1,2048], index: 0, kind: input, shape index: {}]
  %s1 = inlined_call_operand.hbm [shape: f32[1,2048], index: 1, kind: output, shape index: {}]
  %s2 = sld [smem:[#allocation0]]
  $region2: #{tpu_custom_call.1} parent=0
    _
  %s4 = ssub.s32 1, %s2
  %s5 = scalar_select 0, %s4, %s2
  %s7 = sshll.u32 1, 14
  %s8 = sxor.u32 4294967295, %s7
  %s11 = sshll.u32 3, 24
  %s12 = sxor.u32 4294967295, %s11
  %s13 = sand.u32 0, %s12
  %s15 = sor.u32 %s13, 0
  %18 = dma.general %s0, 256, %s1, [#allocation2], [#allocation3], [#allocation4], %s15, 0
  %s19 = smul.u32 1, 16
  %s20 = sshll.u32 %s19, 4
  %21 = dma.done [#allocation2], %s20
  %22 = vsyncmov [#allocation2]
  %s23 = vpop.sfrf %22
  %p24 = scmp.eq.s32.totalorder %s23, 0
  %p25 = pneg %p24
  %27 = shalt.err (%p25)

</llo_original>
